<compile_context>
chip_gen: v7x
topology: tpu7x:2x2x1
jax: 0.10.0
libtpu: 0.0.40
codegen_flags: <defaults>
</compile_context>

<pallas_src>
import jax
import jax.numpy as jnp
from jax.experimental import pallas as pl
from jax.experimental.pallas import tpu as pltpu


def _round_up(x, m):
    return ((x + m - 1) // m) * m


def _make_avg_prelu_kernel(num_inputs, inv_k):
    """Kernel closure over the (static) number of inputs and 1/K."""

    def kernel(*refs):
        # refs = (x_ref_0, ..., x_ref_{K-1}, alpha_ref, o_ref)
        x_refs = refs[:num_inputs]
        alpha_ref = refs[num_inputs]
        o_ref = refs[num_inputs + 1]

        # Unrolled sum (K-1 VPU adds) + one multiply; accumulate in f32.
        acc = x_refs[0][...].astype(jnp.float32)
        for r in x_refs[1:]:
            acc = acc + r[...].astype(jnp.float32)
        mean = acc * inv_k

        a = alpha_ref[...]                               # (TM, 1) -> broadcasts over lanes
        out = jnp.where(mean >= 0.0, mean, a * mean)     # PReLU
        o_ref[...] = out.astype(o_ref.dtype)

    return kernel


def _vmem_budget_and_limit():
    """Generation-aware VMEM working budget / Mosaic scoped limit."""
    try:
        cap = int(pltpu.get_tpu_info().vmem_capacity_bytes)
    except Exception:
        cap = 64 * 1024 * 1024  # conservative: v7x per-TC VMEM
    mib = 1024 * 1024
    # Working-set budget for the double-buffered blocks (leave headroom for
    # alpha block + Mosaic internal scratch).
    budget = max(min(cap // 2 - 8 * mib, 32 * mib), 8 * mib)
    # Scoped VMEM limit handed to the compiler: <=40 MiB (safe on v7x's 64 MiB),
    # always above the working budget.
    limit = max(min(cap - 24 * mib, 40 * mib), budget + 4 * mib)
    return budget, limit


def _choose_tiles(K, M, L, itemsize, budget):
    """Pick (TM, TL): sublane/lane aligned, VMEM-bounded, >=8 grid steps when possible."""
    sublane = {4: 8, 2: 16, 1: 32}.get(itemsize, 8)
    TM = min(_round_up(M, sublane), 512)

    # Largest 128-multiple lane tile whose double-buffered (K inputs + 1 output)
    # working set fits the budget; cap at 2048 lanes (~1-2 MiB per f32 operand).
    per_lane_bytes = 2 * (K + 1) * TM * itemsize
    TL = (budget // (per_lane_bytes * 128)) * 128
    TL = max(128, min(TL, 2048, _round_up(L, 128)))

    def nsteps(tm, tl):
        return pl.cdiv(M, tm) * pl.cdiv(L, tl)

    # Target >= 8 pipeline steps (>= 4 per v7x TensorCore); shrink the lane
    # tile first (keep >= 512 lanes), then the M tile (keep sublane-aligned).
    while nsteps(TM, TL) < 8 and TL > 512:
        TL = max(512, _round_up(TL // 2, 128))
    while nsteps(TM, TL) < 8 and TM > sublane:
        TM = max(sublane, _round_up(TM // 2, sublane))
    return TM, TL


def average_layer(inputs_list, alpha):
    """inputs_list: list of (N, C, H, W) (or (C, H, W)) arrays; alpha: (C,) PReLU slopes."""
    K = len(inputs_list)
    if inputs_list[0].ndim == 3:
        # Match the torch module: unsqueeze to 4-D before PReLU (output stays 4-D).
        inputs_list = [x[None] for x in inputs_list]
    N, C, H, W = inputs_list[0].shape
    M, L = N * C, H * W
    dtype = inputs_list[0].dtype
    itemsize = jnp.dtype(dtype).itemsize

    # Collapse to (M, L); contiguous reshape, no HBM copy.
    xs2 = [x.reshape(M, L) for x in inputs_list]

    # Per-channel alpha tiled across the batch so it lines up with the M axis.
    alpha_rows = jnp.tile(alpha.astype(jnp.float32), N).reshape(M, 1)

    budget, vmem_limit = _vmem_budget_and_limit()
    TM, TL = _choose_tiles(K, M, L, itemsize, budget)

    grid = (pl.cdiv(M, TM), pl.cdiv(L, TL))

    x_spec = pl.BlockSpec((TM, TL), lambda i, j: (i, j))
    alpha_spec = pl.BlockSpec((TM, 1), lambda i, j: (i, 0))   # depends only on M tile
    out_spec = pl.BlockSpec((TM, TL), lambda i, j: (i, j))

    kernel = _make_avg_prelu_kernel(K, float(1.0 / K))

    out = pl.pallas_call(
        kernel,
        out_shape=jax.ShapeDtypeStruct((M, L), dtype),
        grid=grid,
        in_specs=[x_spec] * K + [alpha_spec],
        out_specs=out_spec,
        compiler_params=pltpu.CompilerParams(
            dimension_semantics=("parallel", "parallel"),
            vmem_limit_bytes=int(vmem_limit),
        ),
    )(*xs2, alpha_rows)

    return out.reshape(N, C, H, W)


if __name__ == "__main__":
    key = jax.random.PRNGKey(0)
    N, C, H, W = 2, 4, 16, 16
    K = 3  # number of tensors in the `inputs` list

    keys = jax.random.split(key, K)
    inputs_list = [jax.random.normal(k, (N, C, H, W), dtype=jnp.float32) for k in keys]

    # nn.PReLU(in_ch, 0) has weight shape (C,); the module inits it to 0 (=> ReLU).
    # Use deterministic non-zero slopes so the per-channel broadcast path is exercised.
    alpha = 0.05 * (jnp.arange(C, dtype=jnp.float32) + 1.0)

    out = average_layer(inputs_list, alpha)
    out = jax.block_until_ready(out)

    # Pure-JAX reference for the same forward pass.
    mean_ref = jnp.mean(jnp.stack(inputs_list), axis=0)
    a_b = alpha.reshape(1, C, 1, 1)
    ref = jnp.where(mean_ref >= 0.0, mean_ref, a_b * mean_ref)

    assert out.shape == (N, C, H, W)
    assert jnp.allclose(out, ref, atol=1e-6, rtol=1e-6)
    print("KERNEL_OK")
</pallas_src>

<mosaic_0001>
module attributes {stable_mosaic.version = 11 : i64} {
  func.func @kernel(%arg0: i32, %arg1: i32, %arg2: memref<8x256xf32, #tpu.memory_space<vmem>>, %arg3: memref<8x256xf32, #tpu.memory_space<vmem>>, %arg4: memref<8x256xf32, #tpu.memory_space<vmem>>, %arg5: memref<8x1xf32, #tpu.memory_space<vmem>>, %arg6: memref<8x256xf32, #tpu.memory_space<vmem>>) attributes {dimension_semantics = [#tpu.dimension_semantics<parallel>, #tpu.dimension_semantics<parallel>], iteration_bounds = array<i64: 1, 1>, scalar_prefetch = 0 : i64, scratch_operands = 0 : i64, tpu.core_type = #tpu.core_type<tc>, window_params = [{transform_indices = @transform_0, window_bounds = array<i64: 8, 256>}, {transform_indices = @transform_1, window_bounds = array<i64: 8, 256>}, {transform_indices = @transform_2, window_bounds = array<i64: 8, 256>}, {transform_indices = @transform_3, window_bounds = array<i64: 8, 1>}, {transform_indices = @transform_4, window_bounds = array<i64: 8, 256>}]} {
    %c0 = arith.constant 0 : index
    %c0_0 = arith.constant 0 : index
    %0 = vector.load %arg2[%c0, %c0_0] : memref<8x256xf32, #tpu.memory_space<vmem>>, vector<8x256xf32>
    %c0_1 = arith.constant 0 : index
    %c0_2 = arith.constant 0 : index
    %1 = vector.load %arg3[%c0_1, %c0_2] : memref<8x256xf32, #tpu.memory_space<vmem>>, vector<8x256xf32>
    %2 = arith.addf %0, %1 : vector<8x256xf32>
    %c0_3 = arith.constant 0 : index
    %c0_4 = arith.constant 0 : index
    %3 = vector.load %arg4[%c0_3, %c0_4] : memref<8x256xf32, #tpu.memory_space<vmem>>, vector<8x256xf32>
    %4 = arith.addf %2, %3 : vector<8x256xf32>
    %cst = arith.constant 0.333333343 : f32
    %5 = vector.broadcast %cst : f32 to vector<8x256xf32>
    %6 = arith.mulf %4, %5 : vector<8x256xf32>
    %c0_5 = arith.constant 0 : index
    %c0_6 = arith.constant 0 : index
    %7 = vector.load %arg5[%c0_5, %c0_6] : memref<8x1xf32, #tpu.memory_space<vmem>>, vector<8x1xf32>
    %cst_7 = arith.constant 0.000000e+00 : f32
    %8 = vector.broadcast %cst_7 : f32 to vector<8x256xf32>
    %9 = arith.cmpf oge, %6, %8 : vector<8x256xf32>
    %10 = vector.broadcast %7 : vector<8x1xf32> to vector<8x256xf32>
    %11 = arith.mulf %10, %6 : vector<8x256xf32>
    %12 = arith.select %9, %6, %11 : vector<8x256xi1>, vector<8x256xf32>
    %c0_8 = arith.constant 0 : index
    %c0_9 = arith.constant 0 : index
    %13 = vector.load %arg6[%c0_8, %c0_9] : memref<8x256xf32, #tpu.memory_space<vmem>>, vector<8x256xf32>
    tpu.vector_store %arg6[%c0_8, %c0_9], %12 {strides = array<i32>} : memref<8x256xf32, #tpu.memory_space<vmem>>, vector<8x256xf32>,
    return
  }
  func.func @transform_0(%arg0: i32, %arg1: i32) -> (i32, i32) {
    %c0_i32 = arith.constant 0 : i32
    return %arg0, %arg1 : i32, i32
  }
  func.func @transform_1(%arg0: i32, %arg1: i32) -> (i32, i32) {
    %c0_i32 = arith.constant 0 : i32
    return %arg0, %arg1 : i32, i32
  }
  func.func @transform_2(%arg0: i32, %arg1: i32) -> (i32, i32) {
    %c0_i32 = arith.constant 0 : i32
    return %arg0, %arg1 : i32, i32
  }
  func.func @transform_3(%arg0: i32, %arg1: i32) -> (i32, i32) {
    %c0_i32 = arith.constant 0 : i32
    %c0_i32_0 = arith.constant 0 : i32
    return %arg0, %c0_i32 : i32, i32
  }
  func.func @transform_4(%arg0: i32, %arg1: i32) -> (i32, i32) {
    %c0_i32 = arith.constant 0 : i32
    return %arg0, %arg1 : i32, i32
  }
}

</mosaic_0001>

<llo_original>
// kernel: tpu_custom_call.1
$region0: #{tpu_custom_call.1}
  #allocation0 [shape = 'u32[]', space=smem, size = 0x4, offset = 0x4, fixed_abs, tag = 'smem constant byte address 0x4 - core index']
  #allocation1 [shape = 'u32[144,128]{1,0:T(1,128)}', space=vmem, size = 0x12000, scoped, tag = 'internal scratch']
  %s0 = inlined_call_operand.hbm [shape: f32[8,256], index: 0, kind: input, shape index: {}]
  %s1 = inlined_call_operand.hbm [shape: f32[8,256], index: 1, kind: input, shape index: {}]
  %s2 = inlined_call_operand.vmem [shape: f32[8,256], index: 2, kind: input, shape index: {}]
  %s3 = inlined_call_operand.vmem [shape: f32[8,1], index: 3, kind: input, shape index: {}]
  %s4 = inlined_call_operand.hbm [shape: f32[8,256], index: 4, kind: output, shape index: {}]
  %s5 = sld [smem:[#allocation0]]
  $region34: #{tpu_custom_call.1} parent=0
    _
  %s7 = ssub.s32 1, %s5
  %s8 = scalar_select 0, %s7, %s5
  $region1: #{tpu_custom_call.1} parent=0
    #allocation2 [shape = 'u8[8192]{0}', space=vmem, size = 0x2000, scoped, tag = 'input window, operand 0, single buffered']
    #allocation3 [shape = 's32[1]{0}', space=sflag, size = 0x4, scoped, tag = 'scoped memory for tpu_custom_call.1']
    #allocation4 [shape = 's32[1]{0}', space=sflag, size = 0x4, scoped, tag = 'scoped memory for tpu_custom_call.1']
    #allocation5 [shape = 'u8[8192]{0}', space=vmem, size = 0x2000, scoped, tag = 'input window, operand 1, single buffered']
    #allocation6 [shape = 's32[1]{0}', space=sflag, size = 0x4, scoped, tag = 'scoped memory for tpu_custom_call.1']
    #allocation7 [shape = 'u8[8192]{0}', space=vmem, size = 0x2000, scoped, tag = 'output window, operand 0, single buffered']
    %9 = vsyncpa [#allocation3], 0
    %10 = vsyncpa [#allocation6], 0
    %11 = vsyncpa [#allocation4], 0
    // Predicated region
    $region2: #{tpu_custom_call.1} parent=1 // pred_check
      _
    $region3: #{tpu_custom_call.1} parent=1 // pred_check_branch
      %13 = sbr.rel (0) target = $region5
    $region4: #{tpu_custom_call.1} parent=1 // pred_region
      %s15 = ssub.s32 256, 256
      %16 = vsyncadd [#allocation3], %s15
      %s18 = sshll.u32 [#allocation2], 4
      %s19 = int_to_ptr.vmem [resolvable:$true] %s18
      %21 = dma.hbm_to_vmem [thread:$0]  %s0, 256, %s19, [#allocation3]
    $region5: #{tpu_custom_call.1} parent=1 // pred_fallthru
      _
    // Predicated region
    $region6: #{tpu_custom_call.1} parent=1 // pred_check
      _
    $region7: #{tpu_custom_call.1} parent=1 // pred_check_branch
      %23 = sbr.rel (0) target = $region9
    $region8: #{tpu_custom_call.1} parent=1 // pred_region
      %s25 = ssub.s32 256, 256
      %26 = vsyncadd [#allocation6], %s25
      %s28 = sshll.u32 [#allocation5], 4
      %s29 = int_to_ptr.vmem [resolvable:$true] %s28
      %31 = dma.hbm_to_vmem [thread:$0]  %s1, 256, %s29, [#allocation6]
    $region9: #{tpu_custom_call.1} parent=1 // pred_fallthru
      _
    // Predicated region
    $region10: #{tpu_custom_call.1} parent=1 // pred_check
      _
    $region11: #{tpu_custom_call.1} parent=1 // pred_check_branch
      %33 = sbr.rel (0) target = $region13
    $region12: #{tpu_custom_call.1} parent=1 // pred_region
      _
    $region13: #{tpu_custom_call.1} parent=1 // pred_fallthru
      _
    // Predicated region
    $region14: #{tpu_custom_call.1} parent=1 // pred_check
      _
    $region15: #{tpu_custom_call.1} parent=1 // pred_check_branch
      %35 = sbr.rel (0) target = $region17
    $region16: #{tpu_custom_call.1} parent=1 // pred_region
      _
    $region17: #{tpu_custom_call.1} parent=1 // pred_fallthru
      _
    // Predicated region
    $region18: #{tpu_custom_call.1} parent=1 // pred_check
      _
    $region19: #{tpu_custom_call.1} parent=1 // pred_check_branch
      %37 = sbr.rel (0) target = $region21
    $region20: #{tpu_custom_call.1} parent=1 // pred_region
      %38 = dma.done [#allocation3], 256
    $region21: #{tpu_custom_call.1} parent=1 // pred_fallthru
      _
    // Predicated region
    $region22: #{tpu_custom_call.1} parent=1 // pred_check
      _
    $region23: #{tpu_custom_call.1} parent=1 // pred_check_branch
      %40 = sbr.rel (0) target = $region25
    $region24: #{tpu_custom_call.1} parent=1 // pred_region
      %41 = dma.done [#allocation6], 256
    $region25: #{tpu_custom_call.1} parent=1 // pred_fallthru
      _
    %v42 = vld [vmem:[#allocation2] sm:$0xff]
    %v43 = vld [vmem:[#allocation2 + $0x8] sm:$0xff]
    %v44 = vld [vmem:[#allocation5] sm:$0xff]
    %v45 = vld [vmem:[#allocation5 + $0x8] sm:$0xff]
    %v46 = vadd.f32 %v42, %v44
    %v47 = vadd.f32 %v43, %v45
    %v48 = vld [vmem:[%s2] sm:$0xff]
    %v49 = vld [vmem:[%s2 + $0x8] sm:$0xff]
    %v50 = vadd.f32 %v46, %v48
    %v51 = vadd.f32 %v47, %v49
    %v52 = vmul.f32 %v50, 0.33333334
    %v53 = vmul.f32 %v51, 0.33333334
    %v54 = vld [vmem:[%s3] sm:$0xff]
    %vm55 = vcmp.ge.f32.partialorder %v52, 0.0
    %vm56 = vcmp.ge.f32.partialorder %v53, 0.0
    %58 = vset.pattern.permute.xlu0 0
    %59 = vperm.xlu0 %58, %v54
    %v60 = vpop.permute.xlu0 %59
    %v62 = vmul.f32 %v60, %v52
    %v63 = vmul.f32 %v60, %v53
    %v64 = vsel %vm55, %v52, %v62
    %v65 = vsel %vm56, %v53, %v63
    %66 = vst [vmem:[#allocation7] sm:$0xff] %v64
    %67 = vst [vmem:[#allocation7 + $0x8] sm:$0xff] %v65
    // Predicated region
    $region26: #{tpu_custom_call.1} parent=1 // pred_check
      _
    $region27: #{tpu_custom_call.1} parent=1 // pred_check_branch
      %69 = sbr.rel (0) target = $region29
    $region28: #{tpu_custom_call.1} parent=1 // pred_region
      %s71 = ssub.s32 256, 256
      %72 = vsyncadd [#allocation4], %s71
      %s74 = sshll.u32 [#allocation7], 4
      %s75 = int_to_ptr.vmem [resolvable:$true] %s74
      %77 = dma.vmem_to_hbm [thread:$0]  %s75, 256, %s4, [#allocation4]
    $region29: #{tpu_custom_call.1} parent=1 // pred_fallthru
      _
    // Predicated region
    $region30: #{tpu_custom_call.1} parent=1 // pred_check
      _
    $region31: #{tpu_custom_call.1} parent=1 // pred_check_branch
      %79 = sbr.rel (0) target = $region33
    $region32: #{tpu_custom_call.1} parent=1 // pred_region
      %80 = dma.done [#allocation4], 256
    $region33: #{tpu_custom_call.1} parent=1 // pred_fallthru
      _
    %81 = vsyncpa [#allocation3], 1
    %82 = vsyncpa [#allocation6], 1
    %83 = vsyncpa [#allocation4], 1

</llo_original>
